<compile_context>
chip_gen: v6e
topology: v6e:2x2x1
jax: 0.10.0
libtpu: 0.0.40
codegen_flags: <defaults>
</compile_context>

<pallas_src>
import jax
import jax.numpy as jnp
from jax.experimental import pallas as pl
from jax.experimental.pallas import tpu as pltpu


def _dot_xwT(x, w):
    # x: (m_tile, k_tile), w: (chunk, k_tile) -> (m_tile, chunk)
    # Contract the K axis of both operands (== x @ w.T) without materializing
    # a transposed copy of the weight tile.
    return jax.lax.dot_general(
        x, w,
        dimension_numbers=(((1,), (1,)), ((), ())),
        preferred_element_type=jnp.float32,
    )


def _kernel_single_k(x_ref, w_ref, b_ref, o_ref):
    # Fast path: the whole reduction fits in one K tile -> no accumulator
    # scratch, no extra VMEM load/store round-trip.
    o_ref[...] = (_dot_xwT(x_ref[...], w_ref[...]) + b_ref[...]).astype(o_ref.dtype)


def _kernel_multi_k(x_ref, w_ref, b_ref, o_ref, acc_ref):
    # K-tiled path: accumulate in f32 VMEM scratch across the (last,
    # "arbitrary") reduction axis.
    k = pl.program_id(2)

    @pl.when(k == 0)
    def _init():
        acc_ref[...] = jnp.zeros_like(acc_ref)

    acc_ref[...] += _dot_xwT(x_ref[...], w_ref[...])

    @pl.when(k == pl.num_programs(2) - 1)
    def _finalize():
        o_ref[...] = (acc_ref[...] + b_ref[...]).astype(o_ref.dtype)


def _round_up(v, m):
    return ((v + m - 1) // m) * m


def streaming_linear(x, weight, bias=None, *, chunk_size=None, m_tile=None,
                     k_tile=None, vmem_limit_bytes=32 * 1024 * 1024):
    """y = x @ weight.T + bias, streamed over output-feature chunks."""
    M, K = x.shape
    N, K_w = weight.shape
    if K != K_w:
        raise ValueError(f"in_features mismatch: x has {K}, weight has {K_w}")
    out_dtype = x.dtype
    itemsize = jnp.dtype(x.dtype).itemsize

    # ---- tile selection --------------------------------------------------
    # Batch: keep the whole batch resident unless it is large.
    if m_tile is None:
        m_tile = M if M <= 256 else 256
    if m_tile >= M:
        m_tile = M
    else:
        m_tile = max(8, (m_tile // 8) * 8)

    # Reduction: keep full K resident unless it is very large; tiling K
    # decouples chunk_size from in_features in the VMEM budget.
    if k_tile is None:
        k_tile = K if K <= 8192 else 2048
    if k_tile >= K:
        k_tile = K
    else:
        k_tile = max(128, (k_tile // 128) * 128)

    # Output chunk (the "streamed" weight block): as large as the VMEM budget
    # allows -> fewer grid steps, lane-dense unmasked stores, closer to the
    # HBM roofline. Budget: double-buffered weight/x/out tiles + f32 acc.
    if chunk_size is None:
        budget = int(0.75 * vmem_limit_bytes)            # compiler headroom
        fixed = 2 * m_tile * k_tile * itemsize           # x tile (double buf)
        per_col = (2 * k_tile * itemsize                 # weight tile (double buf)
                   + 2 * m_tile * itemsize               # out tile (double buf)
                   + 4 * m_tile                          # f32 accumulator
                   + 2 * itemsize)                       # bias tile
        chunk_size = max(128, (budget - fixed) // per_col)
        chunk_size = min(chunk_size, 2048)               # diminishing returns
    chunk_size = _round_up(min(chunk_size, _round_up(N, 128)), 128)

    # ---- pad to tile multiples (ragged tail chunk / batch / K) -----------
    Mp = _round_up(M, m_tile)
    Kp = _round_up(K, k_tile)
    Np = _round_up(N, chunk_size)

    xp = x if (Mp, Kp) == (M, K) else jnp.pad(x, ((0, Mp - M), (0, Kp - K)))
    wp = weight if (Np, Kp) == (N, K) else jnp.pad(
        weight, ((0, Np - N), (0, Kp - K)))
    if bias is None:
        bp = jnp.zeros((1, Np), dtype=out_dtype)
    else:
        bp = jnp.pad(bias.astype(out_dtype), (0, Np - N)).reshape(1, Np)

    n_k = Kp // k_tile
    grid = (Mp // m_tile, Np // chunk_size, n_k)

    cost = pl.CostEstimate(
        flops=2 * Mp * Np * Kp,
        transcendentals=0,
        bytes_accessed=(Np * Kp + Mp * Kp + Np) * itemsize
        + Mp * Np * jnp.dtype(out_dtype).itemsize,
    )

    if n_k == 1:
        kernel = _kernel_single_k
        scratch_shapes = []
    else:
        kernel = _kernel_multi_k
        scratch_shapes = [pltpu.VMEM((m_tile, chunk_size), jnp.float32)]

    out = pl.pallas_call(
        kernel,
        out_shape=jax.ShapeDtypeStruct((Mp, Np), out_dtype),
        grid_spec=pltpu.PrefetchScalarGridSpec(
            num_scalar_prefetch=0,
            grid=grid,
            in_specs=[
                # x tile: index independent of j.
                pl.BlockSpec((m_tile, k_tile), lambda i, j, k: (i, k)),
                # one weight chunk streamed HBM->VMEM per grid step,
                # mirroring "only one chunk resident at a time".
                pl.BlockSpec((chunk_size, k_tile), lambda i, j, k: (j, k)),
                # bias tile: index independent of k -> fetched once per chunk.
                pl.BlockSpec((1, chunk_size), lambda i, j, k: (0, j)),
            ],
            out_specs=pl.BlockSpec((m_tile, chunk_size), lambda i, j, k: (i, j)),
            scratch_shapes=scratch_shapes,
        ),
        compiler_params=pltpu.CompilerParams(
            dimension_semantics=("parallel", "parallel", "arbitrary"),
            vmem_limit_bytes=vmem_limit_bytes,
        ),
        cost_estimate=cost,
    )(xp, wp, bp)

    return out[:M, :N] if (Mp, Np) != (M, N) else out


if __name__ == "__main__":
    # Small shapes consistent with the module's 2D forward (batch, in_features).
    batch = 8
    in_features = 256
    out_features = 384        # 3 chunks of 128 -> exercises the streaming loop
    chunk = 128

    key = jax.random.PRNGKey(0)
    kx, kw, kb = jax.random.split(key, 3)
    x = jax.random.normal(kx, (batch, in_features), dtype=jnp.float32)
    # Deterministic synthetic "weight file" contents (no disk I/O):
    weight = 0.05 * jax.random.normal(
        kw, (out_features, in_features), dtype=jnp.float32)
    # Module initializes bias to zeros; use nonzero values to exercise the add.
    bias = jax.random.normal(kb, (out_features,), dtype=jnp.float32)

    y_ref = jnp.dot(x, weight.T, precision=jax.lax.Precision.HIGHEST) + bias[None, :]

    # (a) explicit small chunks, like the module's chunk_size argument
    y1 = jax.block_until_ready(streaming_linear(x, weight, bias, chunk_size=chunk))
    # (b) auto-sized (VMEM-budgeted) chunks -> single-K fast-path kernel
    y2 = jax.block_until_ready(streaming_linear(x, weight, bias))
    # (c) ragged out_features (tail chunk handled by padding in the wrapper)
    y3 = jax.block_until_ready(
        streaming_linear(x, weight[:320], bias[:320], chunk_size=chunk))
    # (d) forced K tiling -> exercises the f32-accumulator reduction kernel
    y4 = jax.block_until_ready(
        streaming_linear(x, weight, bias, chunk_size=chunk, k_tile=128))

    assert y1.shape == (batch, out_features)
    assert y2.shape == (batch, out_features)
    assert y3.shape == (batch, 320)
    assert y4.shape == (batch, out_features)
    assert jnp.allclose(y1, y_ref, atol=2e-3, rtol=2e-3), "mismatch (explicit chunks)"
    assert jnp.allclose(y2, y_ref, atol=2e-3, rtol=2e-3), "mismatch (auto chunks)"
    assert jnp.allclose(y3, y_ref[:, :320], atol=2e-3, rtol=2e-3), "mismatch (ragged)"
    assert jnp.allclose(y4, y_ref, atol=2e-3, rtol=2e-3), "mismatch (K-tiled)"

    print("KERNEL_OK")
</pallas_src>

<mosaic_0001>
module attributes {stable_mosaic.version = 11 : i64} {
  func.func @_kernel_single_k(%arg0: i32, %arg1: i32, %arg2: i32, %arg3: memref<8x256xf32, #tpu.memory_space<vmem>>, %arg4: memref<128x256xf32, #tpu.memory_space<vmem>>, %arg5: memref<1x128xf32, #tpu.memory_space<vmem>>, %arg6: memref<8x128xf32, #tpu.memory_space<vmem>>) attributes {dimension_semantics = [#tpu.dimension_semantics<parallel>, #tpu.dimension_semantics<parallel>, #tpu.dimension_semantics<arbitrary>], iteration_bounds = array<i64: 1, 3, 1>, scalar_prefetch = 0 : i64, scratch_operands = 0 : i64, tpu.core_type = #tpu.core_type<tc>, window_params = [{transform_indices = @transform_0, window_bounds = array<i64: 8, 256>}, {transform_indices = @transform_1, window_bounds = array<i64: 128, 256>}, {transform_indices = @transform_2, window_bounds = array<i64: 1, 128>}, {transform_indices = @transform_3, window_bounds = array<i64: 8, 128>}]} {
    %c0 = arith.constant 0 : index
    %c0_0 = arith.constant 0 : index
    %0 = vector.load %arg3[%c0, %c0_0] : memref<8x256xf32, #tpu.memory_space<vmem>>, vector<8x256xf32>
    %c0_1 = arith.constant 0 : index
    %c0_2 = arith.constant 0 : index
    %1 = vector.load %arg4[%c0_1, %c0_2] : memref<128x256xf32, #tpu.memory_space<vmem>>, vector<128x256xf32>
    %cst = arith.constant dense<0.000000e+00> : vector<8x128xf32>
    %2 = tpu.matmul %0, %1, %cst {dimension_numbers = #tpu.dot_dimension_numbers<[1], [1], [0], [0], [0, 0, 1, 0], [], []>} : vector<8x256xf32>, vector<128x256xf32>, vector<8x128xf32> -> vector<8x128xf32>
    %c0_3 = arith.constant 0 : index
    %c0_4 = arith.constant 0 : index
    %3 = vector.load %arg5[%c0_3, %c0_4] : memref<1x128xf32, #tpu.memory_space<vmem>>, vector<1x128xf32>
    %4 = vector.broadcast %3 : vector<1x128xf32> to vector<8x128xf32>
    %5 = arith.addf %2, %4 : vector<8x128xf32>
    %c0_5 = arith.constant 0 : index
    %c0_6 = arith.constant 0 : index
    %6 = vector.load %arg6[%c0_5, %c0_6] : memref<8x128xf32, #tpu.memory_space<vmem>>, vector<8x128xf32>
    tpu.vector_store %arg6[%c0_5, %c0_6], %5 {strides = array<i32>} : memref<8x128xf32, #tpu.memory_space<vmem>>, vector<8x128xf32>,
    return
  }
  func.func @transform_0(%arg0: i32, %arg1: i32, %arg2: i32) -> (i32, i32) {
    %c0_i32 = arith.constant 0 : i32
    return %arg0, %arg2 : i32, i32
  }
  func.func @transform_1(%arg0: i32, %arg1: i32, %arg2: i32) -> (i32, i32) {
    %c0_i32 = arith.constant 0 : i32
    return %arg1, %arg2 : i32, i32
  }
  func.func @transform_2(%arg0: i32, %arg1: i32, %arg2: i32) -> (i32, i32) {
    %c0_i32 = arith.constant 0 : i32
    %c0_i32_0 = arith.constant 0 : i32
    return %c0_i32, %arg1 : i32, i32
  }
  func.func @transform_3(%arg0: i32, %arg1: i32, %arg2: i32) -> (i32, i32) {
    %c0_i32 = arith.constant 0 : i32
    return %arg0, %arg1 : i32, i32
  }
}

</mosaic_0001>

<llo_original>
// kernel: tpu_custom_call.1
$region0: #{tpu_custom_call.1}
  #allocation0 [shape = 'u32[]', space=smem, size = 0x4, offset = 0x4, fixed_abs, tag = 'smem constant byte address 0x4 - core index']
  #allocation1 [shape = 'u32[144,128]{1,0:T(1,128)}', space=vmem, size = 0x12000, scoped, tag = 'internal scratch']
  %s0 = inlined_call_operand.hbm [shape: f32[8,256], index: 0, kind: input, shape index: {}]
  %s1 = inlined_call_operand.hbm [shape: f32[384,256], index: 1, kind: input, shape index: {}]
  %s2 = inlined_call_operand.vmem [shape: f32[1,384], index: 2, kind: input, shape index: {}]
  %s3 = inlined_call_operand.hbm [shape: f32[8,384], index: 3, kind: output, shape index: {}]
  %s4 = sld [smem:[#allocation0]]
  $region53: #{tpu_custom_call.1} parent=0
    _
  %s6 = ssub.s32 1, %s4
  %s7 = scalar_select 0, %s6, %s4
  $region1: #{tpu_custom_call.1} parent=0
    #allocation2 [shape = 'u8[8192]{0}', space=vmem, size = 0x2000, scoped, tag = 'input window, operand 0, single buffered']
    #allocation3 [shape = 's32[2]{0}', space=sflag, size = 0x8, scoped, tag = 'scoped memory for tpu_custom_call.1']
    #allocation4 [shape = 's32[2]{0}', space=sflag, size = 0x8, scoped, tag = 'scoped memory for tpu_custom_call.1']
    #allocation5 [shape = 'u8[262144]{0}', space=vmem, size = 0x40000, scoped, tag = 'input window, operand 1']
    #allocation6 [shape = 's32[2]{0}', space=sflag, size = 0x8, scoped, tag = 'scoped memory for tpu_custom_call.1']
    #allocation7 [shape = 'u8[8192]{0}', space=vmem, size = 0x2000, scoped, tag = 'output window, operand 0']
    %8 = vsyncpa [#allocation3], 0
    %9 = vsyncpa [#allocation6], 0
    %s10 = scalar_lea.sflag [#allocation6], 1
    %11 = vsyncpa %s10, 0
    %12 = vsyncpa [#allocation4], 0
    %s13 = scalar_lea.sflag [#allocation4], 1
    %14 = vsyncpa %s13, 0
    loop: start=0, step=1, limit=5
    $region2: #{tpu_custom_call.1} parent=1 // loop_pre_header
      _
    $region3: #{tpu_custom_call.1} parent=1 // loop_header
      %s16 = sphi 0, %s20
      %p17 = scmp.ge.s32.totalorder %s16, 5
      %s23 = sphi 0, %s42
      %s24 = sphi 0, %s38
      %s25 = sphi 0, %s34
      %s26 = sphi 0, %s23
      %s27 = sphi 0, %s24
      %s28 = sphi 0, %s25
      %s29 = sphi 0, %s26
      %s30 = sphi 0, %s27
      %s31 = sphi 0, %s28
      %s47 = sphi 0, %s49
      %s50 = sphi 0, %s47
      %s51 = sphi 0, %s50
      %s67 = sphi 0, %s51
      %s75 = sphi 0, %s77
      %s78 = sphi 0, %s75
      %s79 = sphi 0, %s78
      %s95 = sphi 0, %s79
      %s101 = sphi 0, %s103
      %s104 = sphi 0, %s101
      %s105 = sphi 0, %s104
      %s121 = sphi 0, %s105
      %s129 = sphi 0, %s131
      %s132 = sphi 0, %s129
      %s133 = sphi 0, %s132
      %s149 = sphi 0, %s133
    $region4: #{tpu_custom_call.1} parent=1 // loop_header_branch
      %19 = sbr.rel (%p17) target = $region8
    $region5: #{tpu_custom_call.1} parent=1 // loop_body
      %s21 = ssub.s32 %s16, 1
      %s22 = ssub.s32 %s16, 2
      %s32 = sadd.s32 1, %s25
      %p33 = scmp.ge.s32.totalorder %s32, 1
      %s34 = scalar_select %p33, 0, %s32
      %s35 = sadd.s32 1, %s24
      %s36 = scalar_select %p33, %s35, %s24
      %p37 = scmp.ge.s32.totalorder %s36, 3
      %s38 = scalar_select %p37, 0, %s36
      %s39 = sadd.s32 1, %s23
      %s40 = scalar_select %p37, %s39, %s23
      %p41 = scmp.ge.s32.totalorder %s40, 1
      %s42 = scalar_select %p41, 0, %s40
      %s43 = ssub.s32 %s23, %s42
      %s44 = ssub.s32 %s25, %s34
      %s45 = sor.u32 %s43, %s44
      %p46 = scmp.eq.s32.totalorder %s45, 0
      %s48 = sadd.s32 %s47, 1
      %s49 = scalar_select %p46, %s47, %s48
      %p52 = pneg %p46
      %p53 = scmp.eq.s32.totalorder %s16, 2
      %p54 = por %p52, %p53
      %p55 = scmp.ne.s32.totalorder %s47, %s50
      %p56 = scmp.eq.s32.totalorder %s16, 0
      %p57 = por %p55, %p56
      %p58 = scmp.ne.s32.totalorder %s47, %s50
      %p59 = scmp.eq.s32.totalorder %s21, 2
      %p60 = por %p58, %p59
      %p61 = scmp.ne.s32.totalorder %s50, %s51
      %p62 = scmp.eq.s32.totalorder %s21, 0
      %p63 = por %p61, %p62
      %p64 = scmp.ne.s32.totalorder %s50, %s51
      %p65 = scmp.eq.s32.totalorder %s22, 2
      %p66 = por %p64, %p65
      %p68 = scmp.ne.s32.totalorder %s51, %s67
      %p69 = scmp.eq.s32.totalorder %s22, 0
      %p70 = por %p68, %p69
      %s71 = ssub.s32 %s24, %s38
      %s72 = ssub.s32 %s25, %s34
      %s73 = sor.u32 %s71, %s72
      %p74 = scmp.eq.s32.totalorder %s73, 0
      %s76 = sadd.s32 %s75, 1
      %s77 = scalar_select %p74, %s75, %s76
      %p80 = pneg %p74
      %p81 = scmp.eq.s32.totalorder %s16, 2
      %p82 = por %p80, %p81
      %p83 = scmp.ne.s32.totalorder %s75, %s78
      %p84 = scmp.eq.s32.totalorder %s16, 0
      %p85 = por %p83, %p84
      %p86 = scmp.ne.s32.totalorder %s75, %s78
      %p87 = scmp.eq.s32.totalorder %s21, 2
      %p88 = por %p86, %p87
      %p89 = scmp.ne.s32.totalorder %s78, %s79
      %p90 = scmp.eq.s32.totalorder %s21, 0
      %p91 = por %p89, %p90
      %p92 = scmp.ne.s32.totalorder %s78, %s79
      %p93 = scmp.eq.s32.totalorder %s22, 2
      %p94 = por %p92, %p93
      %p96 = scmp.ne.s32.totalorder %s79, %s95
      %p97 = scmp.eq.s32.totalorder %s22, 0
      %p98 = por %p96, %p97
      %s99 = ssub.s32 %s24, %s38
      %p100 = scmp.eq.s32.totalorder %s99, 0
      %s102 = sadd.s32 %s101, 1
      %s103 = scalar_select %p100, %s101, %s102
      %p106 = pneg %p100
      %p107 = scmp.eq.s32.totalorder %s16, 2
      %p108 = por %p106, %p107
      %p109 = scmp.ne.s32.totalorder %s101, %s104
      %p110 = scmp.eq.s32.totalorder %s16, 0
      %p111 = por %p109, %p110
      %p112 = scmp.ne.s32.totalorder %s101, %s104
      %p113 = scmp.eq.s32.totalorder %s21, 2
      %p114 = por %p112, %p113
      %p115 = scmp.ne.s32.totalorder %s104, %s105
      %p116 = scmp.eq.s32.totalorder %s21, 0
      %p117 = por %p115, %p116
      %p118 = scmp.ne.s32.totalorder %s104, %s105
      %p119 = scmp.eq.s32.totalorder %s22, 2
      %p120 = por %p118, %p119
      %p122 = scmp.ne.s32.totalorder %s105, %s121
      %p123 = scmp.eq.s32.totalorder %s22, 0
      %p124 = por %p122, %p123
      %s125 = ssub.s32 %s23, %s42
      %s126 = ssub.s32 %s24, %s38
      %s127 = sor.u32 %s125, %s126
      %p128 = scmp.eq.s32.totalorder %s127, 0
      %s130 = sadd.s32 %s129, 1
      %s131 = scalar_select %p128, %s129, %s130
      %p134 = pneg %p128
      %p135 = scmp.eq.s32.totalorder %s16, 2
      %p136 = por %p134, %p135
      %p137 = scmp.ne.s32.totalorder %s129, %s132
      %p138 = scmp.eq.s32.totalorder %s16, 0
      %p139 = por %p137, %p138
      %p140 = scmp.ne.s32.totalorder %s129, %s132
      %p141 = scmp.eq.s32.totalorder %s21, 2
      %p142 = por %p140, %p141
      %p143 = scmp.ne.s32.totalorder %s132, %s133
      %p144 = scmp.eq.s32.totalorder %s21, 0
      %p145 = por %p143, %p144
      %p146 = scmp.ne.s32.totalorder %s132, %s133
      %p147 = scmp.eq.s32.totalorder %s22, 2
      %p148 = por %p146, %p147
      %p150 = scmp.ne.s32.totalorder %s133, %s149
      %p151 = scmp.eq.s32.totalorder %s22, 0
      %p152 = por %p150, %p151
      %p153 = scmp.le.s32.totalorder 1, %s16
      %p154 = scmp.lt.s32.totalorder %s16, 4
      %p155 = pnand %p153, %p154
      %p156 = pneg %p155
      // Predicated region
      $region9: #{tpu_custom_call.1} parent=5 // pred_check
        _
      $region10: #{tpu_custom_call.1} parent=5 // pred_check_branch
        %158 = sbr.rel (%p155) target = $region12
      $region11: #{tpu_custom_call.1} parent=5 // pred_region
        %s159 = ssub.s32 %s16, 1
        // Predicated region
        $region13: #{tpu_custom_call.1} parent=11 // pred_check
          %p160 = pneg %p63
        $region14: #{tpu_custom_call.1} parent=11 // pred_check_branch
          %162 = sbr.rel (%p160) target = $region16
        $region15: #{tpu_custom_call.1} parent=11 // pred_region
          %s163 = smul.u32 2, %s28
          %s165 = ssub.s32 256, 256
          %166 = vsyncadd [#allocation3], %s165
          %s167 = smul.addr %s26, 2
          %s168 = sadd.s32 %s163, %s167
          %s169 = smul.addr %s168, 128
          %s170 = scalar_lea.hbm %s0, %s169
          %s172 = sshll.u32 [#allocation2], 4
          %s173 = int_to_ptr.vmem [resolvable:$true] %s172
          %175 = dma.hbm_to_vmem [thread:$0]  %s170, 256, %s173, [#allocation3]
        $region16: #{tpu_custom_call.1} parent=11 // pred_fallthru
          _
      $region12: #{tpu_custom_call.1} parent=5 // pred_fallthru
        _
      %p176 = scmp.lt.s32.totalorder %s16, 3
      // Predicated region
      $region17: #{tpu_custom_call.1} parent=5 // pred_check
        %p177 = pneg %p176
      $region18: #{tpu_custom_call.1} parent=5 // pred_check_branch
        %179 = sbr.rel (%p177) target = $region20
      $region19: #{tpu_custom_call.1} parent=5 // pred_region
        // Predicated region
        $region21: #{tpu_custom_call.1} parent=19 // pred_check
          %p180 = pneg %p85
        $region22: #{tpu_custom_call.1} parent=19 // pred_check_branch
          %182 = sbr.rel (%p180) target = $region24
        $region23: #{tpu_custom_call.1} parent=19 // pred_region
          %s183 = sand.u32 %s75, 1
          %s184 = scalar_lea.sflag [#allocation6], %s183
          %s185 = sand.u32 %s75, 1
          %s186 = smul.addr %s185, 256
          %s187 = scalar_lea.vmem [#allocation5], %s186
          %s188 = smul.u32 16, %s24
          %s189 = smul.u32 2, %s25
          %s191 = ssub.s32 4096, 4096
          %192 = vsyncadd %s184, %s191
          %s193 = smul.addr %s188, 2
          %s194 = sadd.s32 %s189, %s193
          %s195 = smul.addr %s194, 128
          %s196 = scalar_lea.hbm %s1, %s195
          %s197 = sshll.u32 %s187, 4
          %s198 = int_to_ptr.vmem [resolvable:$true] %s197
          %203 = dma.hbm_to_vmem [thread:$0]  %s196, 4096, %s198, %s184, 256, 256, 16
        $region24: #{tpu_custom_call.1} parent=19 // pred_fallthru
          _
        // Predicated region
        $region25: #{tpu_custom_call.1} parent=19 // pred_check
          %p204 = pneg %p111
        $region26: #{tpu_custom_call.1} parent=19 // pred_check_branch
          %206 = sbr.rel (%p204) target = $region28
        $region27: #{tpu_custom_call.1} parent=19 // pred_region
          %p207 = scmp.lt.s32.totalorder %s24, 2
          %s208 = scalar_select %p207, %s24, 2
          %s209 = scalar_lea.vmem %s2, %s208
        $region28: #{tpu_custom_call.1} parent=19 // pred_fallthru
          _
      $region20: #{tpu_custom_call.1} parent=5 // pred_fallthru
        _
      %p210 = scmp.le.s32.totalorder 1, %s16
      %p211 = scmp.lt.s32.totalorder %s16, 4
      %p212 = pnand %p210, %p211
      %p213 = pneg %p212
      // Predicated region
      $region29: #{tpu_custom_call.1} parent=5 // pred_check
        _
      $region30: #{tpu_custom_call.1} parent=5 // pred_check_branch
        %215 = sbr.rel (%p212) target = $region32
      $region31: #{tpu_custom_call.1} parent=5 // pred_region
        %s216 = ssub.s32 %s16, 1
        // Predicated region
        $region33: #{tpu_custom_call.1} parent=31 // pred_check
          %p217 = pneg %p63
        $region34: #{tpu_custom_call.1} parent=31 // pred_check_branch
          %219 = sbr.rel (%p217) target = $region36
        $region35: #{tpu_custom_call.1} parent=31 // pred_region
          %220 = dma.done [#allocation3], 256
        $region36: #{tpu_custom_call.1} parent=31 // pred_fallthru
          _
        %s221 = sand.u32 %s78, 1
        %s222 = scalar_lea.sflag [#allocation6], %s221
        %s223 = sand.u32 %s78, 1
        %s224 = smul.addr %s223, 256
        %s225 = scalar_lea.vmem [#allocation5], %s224
        // Predicated region
        $region37: #{tpu_custom_call.1} parent=31 // pred_check
          %p226 = pneg %p91
        $region38: #{tpu_custom_call.1} parent=31 // pred_check_branch
          %228 = sbr.rel (%p226) target = $region40
        $region39: #{tpu_custom_call.1} parent=31 // pred_region
          %229 = dma.done %s222, 4096
        $region40: #{tpu_custom_call.1} parent=31 // pred_fallthru
          _
        %p230 = pneg %p63
        %p231 = pneg %p60
        %s232 = sand.u32 %s78, 1
        %s233 = scalar_lea.sflag [#allocation6], %s232
        %s234 = sand.u32 %s78, 1
        %s235 = smul.addr %s234, 256
        %s236 = scalar_lea.vmem [#allocation5], %s235
        %p237 = pneg %p91
        %p238 = pneg %p88
        %p239 = scmp.lt.s32.totalorder %s27, 2
        %s240 = scalar_select %p239, %s27, 2
        %s241 = scalar_lea.vmem %s2, %s240
        %p242 = pneg %p117
        %p243 = pneg %p114
        %p244 = pneg %p145
        %p245 = pneg %p142
        %s246 = sand.u32 %s132, 1
        %s247 = scalar_lea.sflag [#allocation4], %s246
        %s248 = sand.u32 %s132, 1
        %s249 = smul.addr %s248, 8
        %s250 = scalar_lea.vmem [#allocation7], %s249
        %s251 = smul.u32 2, %s28
        %s252 = smul.u32 16, %s27
        %s253 = smul.u32 2, %s28
        %p254 = scmp.lt.s32.totalorder %s27, 2
        %s255 = scalar_select %p254, %s27, 2
        %s256 = scalar_lea.vmem %s2, %s255
        %v257 = vld [vmem:[#allocation2] sm:$0xff]
        %v258 = vld [vmem:[#allocation2 + $0x8] sm:$0xff]
        %v259 = vld [vmem:[%s225] sm:$0xff]
        %v260 = vld [vmem:[%s225 + $0x8] sm:$0xff]
        %v261 = vld [vmem:[%s225 + $0x10] sm:$0xff]
        %v262 = vld [vmem:[%s225 + $0x18] sm:$0xff]
        %v263 = vld [vmem:[%s225 + $0x20] sm:$0xff]
        %v264 = vld [vmem:[%s225 + $0x28] sm:$0xff]
        %v265 = vld [vmem:[%s225 + $0x30] sm:$0xff]
        %v266 = vld [vmem:[%s225 + $0x38] sm:$0xff]
        %v267 = vld [vmem:[%s225 + $0x40] sm:$0xff]
        %v268 = vld [vmem:[%s225 + $0x48] sm:$0xff]
        %v269 = vld [vmem:[%s225 + $0x50] sm:$0xff]
        %v270 = vld [vmem:[%s225 + $0x58] sm:$0xff]
        %v271 = vld [vmem:[%s225 + $0x60] sm:$0xff]
        %v272 = vld [vmem:[%s225 + $0x68] sm:$0xff]
        %v273 = vld [vmem:[%s225 + $0x70] sm:$0xff]
        %v274 = vld [vmem:[%s225 + $0x78] sm:$0xff]
        %v275 = vld [vmem:[%s225 + $0x80] sm:$0xff]
        %v276 = vld [vmem:[%s225 + $0x88] sm:$0xff]
        %v277 = vld [vmem:[%s225 + $0x90] sm:$0xff]
        %v278 = vld [vmem:[%s225 + $0x98] sm:$0xff]
        %v279 = vld [vmem:[%s225 + $0xa0] sm:$0xff]
        %v280 = vld [vmem:[%s225 + $0xa8] sm:$0xff]
        %v281 = vld [vmem:[%s225 + $0xb0] sm:$0xff]
        %v282 = vld [vmem:[%s225 + $0xb8] sm:$0xff]
        %v283 = vld [vmem:[%s225 + $0xc0] sm:$0xff]
        %v284 = vld [vmem:[%s225 + $0xc8] sm:$0xff]
        %v285 = vld [vmem:[%s225 + $0xd0] sm:$0xff]
        %v286 = vld [vmem:[%s225 + $0xd8] sm:$0xff]
        %v287 = vld [vmem:[%s225 + $0xe0] sm:$0xff]
        %v288 = vld [vmem:[%s225 + $0xe8] sm:$0xff]
        %v289 = vld [vmem:[%s225 + $0xf0] sm:$0xff]
        %v290 = vld [vmem:[%s225 + $0xf8] sm:$0xff]
        %v291 = vld [vmem:[%s256] sm:$0x1]
        %v293 = vlaneseq
        %v294 = vshrl.u32 %v293, 7
        %v295 = vsub.s32 0, %v294
        %v296 = vrot.slane %v291, %v295
        %298 = vmatprep.subr.mxu0 %v290
        %299 = vmatpush1.xpose.msra.mxu0 %v289
        %300 = vmatprep.subr.mxu0 %v288
        %301 = vmatpush1.xpose.msra.mxu0 %v287
        %302 = vmatprep.subr.mxu0 %v286
        %303 = vmatpush1.xpose.msra.mxu0 %v285
        %304 = vmatprep.subr.mxu0 %v284
        %305 = vmatpush1.xpose.msra.mxu0 %v283
        %306 = vmatprep.subr.mxu0 %v282
        %307 = vmatpush1.xpose.msra.mxu0 %v281
        %308 = vmatprep.subr.mxu0 %v280
        %309 = vmatpush1.xpose.msra.mxu0 %v279
        %310 = vmatprep.subr.mxu0 %v278
        %311 = vmatpush1.xpose.msra.mxu0 %v277
        %312 = vmatprep.subr.mxu0 %v276
        %313 = vmatpush1.xpose.msra.mxu0 %v275
        %314 = vmatprep.subr.mxu0 %v274
        %315 = vmatpush1.xpose.msra.mxu0 %v273
        %316 = vmatprep.subr.mxu0 %v272
        %317 = vmatpush1.xpose.msra.mxu0 %v271
        %318 = vmatprep.subr.mxu0 %v270
        %319 = vmatpush1.xpose.msra.mxu0 %v269
        %320 = vmatprep.subr.mxu0 %v268
        %321 = vmatpush1.xpose.msra.mxu0 %v267
        %322 = vmatprep.subr.mxu0 %v266
        %323 = vmatpush1.xpose.msra.mxu0 %v265
        %324 = vmatprep.subr.mxu0 %v264
        %325 = vmatpush1.xpose.msra.mxu0 %v263
        %326 = vmatprep.subr.mxu0 %v262
        %327 = vmatpush1.xpose.msra.mxu0 %v261
        %328 = vmatprep.subr.mxu0 %v260
        %329 = vmatpush1.xpose.msra.mxu0 %v259
        %330 = vmatprep.subr.mxu0 0.0
        %331 = vmatpush2.xpose.msra.mxu0 0.0
        %332 = vmatprep.subr.mxu0 0.0
        %333 = vmatpush2.xpose.msra.mxu0 0.0
        %334 = vmatprep.subr.mxu0 0.0
        %335 = vmatpush2.xpose.msra.mxu0 0.0
        %336 = vmatprep.subr.mxu0 0.0
        %337 = vmatpush2.xpose.msra.mxu0 0.0
        %338 = vmatprep.subr.mxu0 0.0
        %339 = vmatpush2.xpose.msra.mxu0 0.0
        %340 = vmatprep.subr.mxu0 0.0
        %341 = vmatpush2.xpose.msra.mxu0 0.0
        %342 = vmatprep.subr.mxu0 0.0
        %343 = vmatpush2.xpose.msra.mxu0 0.0
        %344 = vmatprep.subr.mxu0 0.0
        %345 = vmatpush2.xpose.msra.mxu0 0.0
        %346 = vmatprep.subr.mxu0 0.0
        %347 = vmatpush2.xpose.msra.mxu0 0.0
        %348 = vmatprep.subr.mxu0 0.0
        %349 = vmatpush2.xpose.msra.mxu0 0.0
        %350 = vmatprep.subr.mxu0 0.0
        %351 = vmatpush2.xpose.msra.mxu0 0.0
        %352 = vmatprep.subr.mxu0 0.0
        %353 = vmatpush2.xpose.msra.mxu0 0.0
        %354 = vmatprep.subr.mxu0 0.0
        %355 = vmatpush2.xpose.msra.mxu0 0.0
        %356 = vmatprep.subr.mxu0 0.0
        %357 = vmatpush2.xpose.msra.mxu0 0.0
        %358 = vmatprep.subr.mxu0 0.0
        %359 = vmatpush2.xpose.msra.mxu0 0.0
        %360 = vmatprep.subr.mxu0 0.0
        %361 = vmatpush2.xpose.msra.mxu0 0.0
        %362 = vmatprep.mubr.f32.mxu0 %v258
        %363 = vmatmul.mubr.f32.gmra.mxu0 %v257
        %v364 = vpop.f32.mrf.mxu0
        %v365 = vadd.f32 %v296, %v364
        %v366 = vpop.f32.mrf.mxu0
        %367 = vdwg.mxu0
        %368 = vst [vmem:[%s250] sm:$0xff] %v365
        %s369 = sand.u32 %s132, 1
        %s370 = scalar_lea.sflag [#allocation4], %s369
        %s371 = sand.u32 %s132, 1
        %s372 = smul.addr %s371, 8
        %s373 = scalar_lea.vmem [#allocation7], %s372
        // Predicated region
        $region41: #{tpu_custom_call.1} parent=31 // pred_check
          %p374 = pneg %p142
        $region42: #{tpu_custom_call.1} parent=31 // pred_check_branch
          %376 = sbr.rel (%p374) target = $region44
        $region43: #{tpu_custom_call.1} parent=31 // pred_region
          %s378 = ssub.s32 128, 128
          %379 = vsyncadd %s370, %s378
          %s380 = smul.addr %s26, 3
          %s381 = sadd.s32 %s27, %s380
          %s382 = smul.addr %s381, 128
          %s383 = scalar_lea.hbm %s3, %s382
          %s385 = sshll.u32 %s373, 4
          %s386 = int_to_ptr.vmem [resolvable:$true] %s385
          %388 = dma.vmem_to_hbm [thread:$0]  %s386, 128, %s383, %s370
        $region44: #{tpu_custom_call.1} parent=31 // pred_fallthru
          _
      $region32: #{tpu_custom_call.1} parent=5 // pred_fallthru
        _
      %p389 = scmp.le.s32.totalorder 2, %s16
      // Predicated region
      $region45: #{tpu_custom_call.1} parent=5 // pred_check
        %p390 = pneg %p389
      $region46: #{tpu_custom_call.1} parent=5 // pred_check_branch
        %392 = sbr.rel (%p390) target = $region48
      $region47: #{tpu_custom_call.1} parent=5 // pred_region
        %s393 = ssub.s32 %s16, 2
        // Predicated region
        $region49: #{tpu_custom_call.1} parent=47 // pred_check
          %p394 = pneg %p148
        $region50: #{tpu_custom_call.1} parent=47 // pred_check_branch
          %396 = sbr.rel (%p394) target = $region52
        $region51: #{tpu_custom_call.1} parent=47 // pred_region
          %s397 = sand.u32 %s133, 1
          %s398 = scalar_lea.sflag [#allocation4], %s397
          %s399 = sand.u32 %s133, 1
          %s400 = smul.addr %s399, 8
          %s401 = scalar_lea.vmem [#allocation7], %s400
          %402 = dma.done %s398, 128
        $region52: #{tpu_custom_call.1} parent=47 // pred_fallthru
          _
      $region48: #{tpu_custom_call.1} parent=5 // pred_fallthru
        _
    $region6: #{tpu_custom_call.1} parent=1 // loop_footer
      %s20 = sadd.s32 1, %s16
    $region7: #{tpu_custom_call.1} parent=1 // loop_footer_branch
      %15 = sbr.rel target = $region3
    $region8: #{tpu_custom_call.1} parent=1 // loop_exit
      _
    %403 = vsyncpa [#allocation3], 1
    %s404 = scalar_lea.sflag [#allocation3], 1
    %405 = vsyncpa %s404, 1
    %406 = vsyncpa [#allocation6], 1
    %s407 = scalar_lea.sflag [#allocation6], 1
    %408 = vsyncpa %s407, 1
    %409 = vsyncpa [#allocation4], 1
    %s410 = scalar_lea.sflag [#allocation4], 1
    %411 = vsyncpa %s410, 1

</llo_original>
